<compile_context>
chip_gen: v7x
topology: tpu7x:2x2x1
jax: 0.10.0
libtpu: 0.0.40
codegen_flags: <defaults>
</compile_context>

<pallas_src>
import math

import jax
import jax.numpy as jnp
from jax.experimental import pallas as pl
from jax.experimental.pallas import tpu as pltpu


# ----------------------------- helpers (glue) -----------------------------

def flatten_ids(ids):
    return [c for cluster in ids for c in cluster]


def inv(perm):
    inverse = [0] * len(perm)
    for i, p in enumerate(perm):
        inverse[p] = i
    return inverse


def _round_up(x, m):
    return ((x + m - 1) // m) * m


def _pick_tile(dim, cap):
    """Largest tile <= cap dividing dim; prefer 256-aligned (v6e/v7x MXU width),
    then 128-aligned (lane width / v5e MXU), else the full dim."""
    if dim <= cap:
        return dim
    for step in (256, 128):
        t = (cap // step) * step
        while t >= step:
            if dim % t == 0:
                return t
            t -= step
    return dim


# ------------------------------ Pallas kernels ------------------------------

def _matmul_bias_kernel(x_ref, w_ref, b_ref, o_ref):
    # Single K pass: out = x @ w + b. No scratch accumulator, no per-step RMW.
    o_ref[...] = (jnp.dot(x_ref[...], w_ref[...],
                          preferred_element_type=jnp.float32)
                  + b_ref[...]).astype(o_ref.dtype)


def _matmul_bias_acc_kernel(x_ref, w_ref, b_ref, o_ref, acc_ref):
    # K-tiled path: f32 VMEM accumulator; bias folded into the k==0 store
    # (saves the separate zero-init store and the final bias add pass).
    k = pl.program_id(2)
    d = jnp.dot(x_ref[...], w_ref[...], preferred_element_type=jnp.float32)

    @pl.when(k == 0)
    def _():
        acc_ref[...] = b_ref[...] + d

    @pl.when(k > 0)
    def _():
        acc_ref[...] += d

    @pl.when(k == pl.num_programs(2) - 1)
    def _():
        o_ref[...] = acc_ref[...].astype(o_ref.dtype)


def linear_bias_pallas(x_flat, w_pad, b_pad, *, out_cols,
                       compute_dtype=jnp.bfloat16,
                       tm_cap=256, tn_cap=512, k_single_cap=2048, tk_cap=1024):
    """(x_flat @ w + b)[:, :out_cols], with pre-padded weight/bias.

    x_flat : (bs, K)  float32   (K <= Kp; padded & cast to bf16 here)
    w_pad  : (Kp, Mp) compute_dtype, Kp/Mp multiples of 128, zero-padded
    b_pad  : (Mp,)    float32, zero-padded
    Returns (bs, out_cols) float32.
    """
    bs, K = x_flat.shape
    Kp, Mp = w_pad.shape
    assert Kp % 128 == 0 and Mp % 128 == 0
    assert K <= Kp and out_cols <= Mp and b_pad.shape == (Mp,)

    # Batch tiling: multiple of 16 (bf16 sublane pack), capped so blocks stay
    # bounded and large bs gets sharded across TensorCores.
    tm = min(tm_cap, _round_up(bs, 16))
    bs_pad = _round_up(bs, tm)

    tn = _pick_tile(Mp, tn_cap)
    k_tiled = Kp > k_single_cap
    tk = _pick_tile(Kp, tk_cap) if k_tiled else Kp

    n_b, n_j, n_k = bs_pad // tm, Mp // tn, Kp // tk

    # Pad + cast activations in one pass (zero rows/cols contribute nothing).
    xc = jnp.pad(x_flat.astype(compute_dtype),
                 ((0, bs_pad - bs), (0, Kp - K)))
    b2 = b_pad.reshape(1, Mp).astype(jnp.float32)

    itemsize = jnp.dtype(compute_dtype).itemsize

    # Deeper weight pipeline only when the weight stream actually spans many
    # grid steps (hides HBM latency in the small-bs, weight-bound regime).
    use_deep_w = (n_b * n_j * n_k) >= 4
    w_buffers = 3 if use_deep_w else 2
    w_spec_kwargs = dict(pipeline_mode=pl.Buffered(3)) if use_deep_w else {}

    # VMEM budget -> explicit scoped limit (safe on v5e/v6e/v7x).
    block_bytes = (2 * tm * tk * itemsize          # x double buffer
                   + w_buffers * tk * tn * itemsize
                   + 2 * 8 * tn * 4                # bias (sublane-padded)
                   + 2 * tm * tn * 4               # out double buffer
                   + (tm * tn * 4 if k_tiled else 0))
    vmem_limit = min(max(2 * block_bytes + (2 << 20), 32 << 20), 48 << 20)

    cost = pl.CostEstimate(
        flops=2 * bs_pad * Kp * Mp,
        transcendentals=0,
        bytes_accessed=(bs_pad * Kp * itemsize        # x read once per b tile
                        + n_b * Kp * Mp * itemsize    # w re-read per b tile
                        + n_b * Mp * 4                # bias
                        + bs_pad * Mp * 4),           # out write
    )

    if not k_tiled:
        out = pl.pallas_call(
            _matmul_bias_kernel,
            out_shape=jax.ShapeDtypeStruct((bs_pad, Mp), jnp.float32),
            grid_spec=pltpu.PrefetchScalarGridSpec(
                num_scalar_prefetch=0,
                grid=(n_b, n_j),
                in_specs=[
                    # x resident per batch tile (index independent of j)
                    pl.BlockSpec((tm, Kp), lambda b, j: (b, 0)),
                    pl.BlockSpec((Kp, tn), lambda b, j: (0, j),
                                 **w_spec_kwargs),
                    pl.BlockSpec((1, tn), lambda b, j: (0, j)),
                ],
                out_specs=pl.BlockSpec((tm, tn), lambda b, j: (b, j)),
            ),
            compiler_params=pltpu.CompilerParams(
                dimension_semantics=("parallel", "parallel"),
                vmem_limit_bytes=vmem_limit,
            ),
            cost_estimate=cost,
        )(xc, w_pad, b2)
    else:
        out = pl.pallas_call(
            _matmul_bias_acc_kernel,
            out_shape=jax.ShapeDtypeStruct((bs_pad, Mp), jnp.float32),
            grid_spec=pltpu.PrefetchScalarGridSpec(
                num_scalar_prefetch=0,
                grid=(n_b, n_j, n_k),
                in_specs=[
                    pl.BlockSpec((tm, tk), lambda b, j, k: (b, k)),
                    pl.BlockSpec((tk, tn), lambda b, j, k: (k, j),
                                 **w_spec_kwargs),
                    pl.BlockSpec((1, tn), lambda b, j, k: (0, j)),
                ],
                out_specs=pl.BlockSpec((tm, tn), lambda b, j, k: (b, j)),
                scratch_shapes=[pltpu.VMEM((tm, tn), jnp.float32)],
            ),
            compiler_params=pltpu.CompilerParams(
                dimension_semantics=("parallel", "parallel", "arbitrary"),
                vmem_limit_bytes=vmem_limit,
            ),
            cost_estimate=cost,
        )(xc, w_pad, b2)

    return out[:bs, :out_cols]


# --------------------------- module (JAX wrapper) ---------------------------

class SnCoarsenLayerPallas:
    """JAX / Pallas port of Sn_coarsen_layer (forward pass only)."""

    def __init__(self, cluster_ids, in_features, out_features, key,
                 compute_dtype=jnp.bfloat16):
        self.cluster_ids = cluster_ids
        self.permute_ids = flatten_ids(cluster_ids)
        self.inv_permute = inv(self.permute_ids)
        self.num_cluster = len(cluster_ids)
        self.num_nodes = len(self.permute_ids)
        self.in_features = in_features
        self.out_features = out_features
        self.compute_dtype = compute_dtype

        # cluster index of each ORIGINAL node id: absorbs permute/inv_permute.
        member_orig = [0] * self.num_nodes
        for ci, cluster in enumerate(cluster_ids):
            for node in cluster:
                member_orig[node] = ci
        self.member_orig = jnp.asarray(member_orig, dtype=jnp.int32)

        # cluster index of each PERMUTED position (dense reference only).
        member_perm = []
        for ci, cluster in enumerate(cluster_ids):
            member_perm += [ci] * len(cluster)
        self.member_perm = jnp.asarray(member_perm, dtype=jnp.int32)

        # Parameter init mirroring the torch shapes:
        #   w_diag: (in*out, C) ~ U[0,1)   w_off: (in*out, C, C) ~ U[0,1)
        #   b1:     (out,)      ~ U[-1/sqrt(out), 1/sqrt(out)]
        k1, k2, k3 = jax.random.split(key, 3)
        self.w_diag = jax.random.uniform(
            k1, (in_features * out_features, self.num_cluster), jnp.float32)
        self.w_off = jax.random.uniform(
            k2, (in_features * out_features, self.num_cluster, self.num_cluster),
            jnp.float32)
        stdv = 1.0 / math.sqrt(out_features)
        self.b1 = jax.random.uniform(
            k3, (out_features,), jnp.float32, minval=-stdv, maxval=stdv)

        # Kernel weights: built ONCE, already in (K, M) = (C*IF, C*OF) layout,
        # zero-padded to lane-dense multiples of 128 and cast once to bf16.
        self.K = self.num_cluster * in_features
        self.M = self.num_cluster * out_features
        self.Kp = _round_up(self.K, 128)
        self.Mp = _round_up(self.M, 128)

        self.w_kn = self.build_cluster_weight()                 # f32 (K, M)
        w_padded = jnp.pad(self.w_kn,
                           ((0, self.Kp - self.K), (0, self.Mp - self.M)))
        self.w_kn_c = w_padded.astype(compute_dtype)            # (Kp, Mp) bf16

        self.b_flat = jnp.tile(self.b1, self.num_cluster)       # (M,) f32
        self.b_pad = jnp.pad(self.b_flat, (0, self.Mp - self.M))  # (Mp,) f32

    # -------------------------- weight construction --------------------------

    def build_cluster_weight(self):
        """Cluster-level weight flattened to (C*IF, C*OF).

        Wc[c, c', i, o] = [c==c'] * w_diag[o*IF+i, c] + (1/N) * w_off[o*IF+i, c, c']
        laid out so that
          out_flat[b, c*OF+o] = sum_{c',i} pooled_flat[b, c'*IF+i] * W[c'*IF+i, c*OF+o].
        Covers both torch branches (num_cluster < num_nodes and ==).
        """
        C, IF, OF, N = (self.num_cluster, self.in_features,
                        self.out_features, self.num_nodes)
        wd = self.w_diag.reshape(OF, IF, C)                   # [o, i, c]
        wo = self.w_off.reshape(OF, IF, C, C)                 # [o, i, c, c']
        Wc = (1.0 / N) * jnp.transpose(wo, (2, 3, 1, 0))      # [c, c', i, o]
        Wc = Wc + (jnp.eye(C, dtype=jnp.float32)[:, :, None, None]
                   * jnp.transpose(wd, (2, 1, 0))[:, None, :, :])
        # rows: (c', i)   cols: (c, o)
        return jnp.transpose(Wc, (1, 2, 0, 3)).reshape(C * IF, C * OF)

    def build_dense_W(self):
        """Dense (OF*N, IF*N) weight exactly as the PyTorch forward builds it.
        Verification only -- the kernel path never materializes this."""
        N, IF, OF = self.num_nodes, self.in_features, self.out_features
        m = self.member_perm
        Mo = self.w_off[:, m[:, None], m[None, :]]                 # (IF*OF, N, N)
        same = (m[:, None] == m[None, :])
        Md = jnp.where(same[None, :, :], self.w_diag[:, m][:, :, None], 0.0)
        M_full = Md + (1.0 / N) * Mo
        return (M_full.reshape(OF, IF, N, N)
                      .transpose(0, 2, 1, 3)
                      .reshape(OF * N, IF * N))

    # -------------------------------- forward --------------------------------

    def __call__(self, x):
        bs, N, IF = x.shape
        assert N == self.num_nodes and IF == self.in_features
        C, OF = self.num_cluster, self.out_features

        # 1) pool node features within each cluster (replaces node permutation)
        # TODO(synk): per-node pooling/broadcast over nodes stays as XLA
        #             scatter-add / gather glue around the Pallas GEMM.
        pooled = jnp.zeros((bs, C, IF), jnp.float32)
        pooled = pooled.at[:, self.member_orig, :].add(x.astype(jnp.float32))
        pooled_flat = pooled.reshape(bs, C * IF)

        # 2) cluster-level matmul + bias on the MXU (Pallas kernel, padded
        #    lane-dense weights, batch-tiled grid)
        out_flat = linear_bias_pallas(pooled_flat, self.w_kn_c, self.b_pad,
                                      out_cols=C * OF,
                                      compute_dtype=self.compute_dtype)
        out_cluster = out_flat.reshape(bs, C, OF)

        # 3) broadcast each cluster's output back to its member nodes
        return out_cluster[:, self.member_orig, :]                 # (bs, N, OF)


# ----------------------------------- main -----------------------------------

if __name__ == "__main__":
    key = jax.random.PRNGKey(0)
    k_param, k_x = jax.random.split(key)

    # small config: 16 nodes grouped into 4 clusters of 4 (non-trivial permutation)
    cluster_ids = [[0, 4, 8, 12], [1, 5, 9, 13], [2, 6, 10, 14], [3, 7, 11, 15]]
    in_features = 8
    out_features = 8
    bs = 8
    N = 16

    layer = SnCoarsenLayerPallas(cluster_ids, in_features, out_features, k_param)
    x = jax.random.normal(k_x, (bs, N, in_features), dtype=jnp.float32)

    out = jax.block_until_ready(layer(x))
    assert out.shape == (bs, N, out_features)

    C, IF, OF = layer.num_cluster, in_features, out_features
    hi = jax.lax.Precision.HIGHEST

    # --- reference A: exact PyTorch semantics (dense W + permutations), f32 ---
    W = layer.build_dense_W()
    perm = jnp.asarray(layer.permute_ids, jnp.int32)
    inv_perm = jnp.asarray(layer.inv_permute, jnp.int32)
    xp = x[:, perm, :]
    x_flat = jnp.transpose(xp, (0, 2, 1)).reshape(bs, IF * N)
    refA_flat = jnp.dot(x_flat, W.T, precision=hi)
    refA = (refA_flat.reshape(bs, OF, N).transpose(0, 2, 1)[:, inv_perm, :]
            + layer.b1[None, None, :])

    # --- cluster-structured path in pure f32 (validates the rewrite) ---
    pooled = jnp.zeros((bs, C, IF), jnp.float32).at[:, layer.member_orig, :].add(x)
    pflat = pooled.reshape(bs, C * IF)
    clu_f32 = (jnp.dot(pflat, layer.w_kn, precision=hi)
               + layer.b_flat[None, :]).reshape(bs, C, OF)[:, layer.member_orig, :]
    errA = float(jnp.max(jnp.abs(clu_f32 - refA)))
    assert jnp.allclose(clu_f32, refA, atol=1e-3, rtol=1e-3), errA

    # --- reference B: same bf16 casts / f32 accumulation as the kernel ---
    w_unpadded_c = layer.w_kn_c[:layer.K, :layer.M].astype(jnp.float32)
    refB_flat = (jnp.dot(pflat.astype(layer.compute_dtype).astype(jnp.float32),
                         w_unpadded_c, precision=hi)
                 + layer.b_flat[None, :])
    refB = refB_flat.reshape(bs, C, OF)[:, layer.member_orig, :]
    errB = float(jnp.max(jnp.abs(out - refB)))
    assert jnp.allclose(out, refB, atol=1e-3, rtol=1e-3), errB

    print("KERNEL_OK")
</pallas_src>

<mosaic_0001>
module attributes {stable_mosaic.version = 11 : i64} {
  func.func @_matmul_bias_kernel(%arg0: i32, %arg1: i32, %arg2: memref<16x128xbf16, #tpu.memory_space<vmem>>, %arg3: memref<128x128xbf16, #tpu.memory_space<vmem>>, %arg4: memref<1x128xf32, #tpu.memory_space<vmem>>, %arg5: memref<16x128xf32, #tpu.memory_space<vmem>>) attributes {dimension_semantics = [#tpu.dimension_semantics<parallel>, #tpu.dimension_semantics<parallel>], iteration_bounds = array<i64: 1, 1>, scalar_prefetch = 0 : i64, scratch_operands = 0 : i64, tpu.core_type = #tpu.core_type<tc>, window_params = [{transform_indices = @transform_0, window_bounds = array<i64: 16, 128>}, {transform_indices = @transform_1, window_bounds = array<i64: 128, 128>}, {transform_indices = @transform_2, window_bounds = array<i64: 1, 128>}, {transform_indices = @transform_3, window_bounds = array<i64: 16, 128>}]} {
    %c0 = arith.constant 0 : index
    %c0_0 = arith.constant 0 : index
    %0 = vector.load %arg2[%c0, %c0_0] : memref<16x128xbf16, #tpu.memory_space<vmem>>, vector<16x128xbf16>
    %c0_1 = arith.constant 0 : index
    %c0_2 = arith.constant 0 : index
    %1 = vector.load %arg3[%c0_1, %c0_2] : memref<128x128xbf16, #tpu.memory_space<vmem>>, vector<128x128xbf16>
    %cst = arith.constant dense<0.000000e+00> : vector<16x128xf32>
    %2 = tpu.matmul %0, %1, %cst {dimension_numbers = #tpu.dot_dimension_numbers<[1], [0], [0], [1], [0, 0, 1, 1], [], []>} : vector<16x128xbf16>, vector<128x128xbf16>, vector<16x128xf32> -> vector<16x128xf32>
    %c0_3 = arith.constant 0 : index
    %c0_4 = arith.constant 0 : index
    %3 = vector.load %arg4[%c0_3, %c0_4] : memref<1x128xf32, #tpu.memory_space<vmem>>, vector<1x128xf32>
    %4 = vector.broadcast %3 : vector<1x128xf32> to vector<16x128xf32>
    %5 = arith.addf %2, %4 : vector<16x128xf32>
    %c0_5 = arith.constant 0 : index
    %c0_6 = arith.constant 0 : index
    %6 = vector.load %arg5[%c0_5, %c0_6] : memref<16x128xf32, #tpu.memory_space<vmem>>, vector<16x128xf32>
    tpu.vector_store %arg5[%c0_5, %c0_6], %5 {strides = array<i32>} : memref<16x128xf32, #tpu.memory_space<vmem>>, vector<16x128xf32>,
    return
  }
  func.func @transform_0(%arg0: i32, %arg1: i32) -> (i32, i32) {
    %c0_i32 = arith.constant 0 : i32
    %c0_i32_0 = arith.constant 0 : i32
    return %arg0, %c0_i32 : i32, i32
  }
  func.func @transform_1(%arg0: i32, %arg1: i32) -> (i32, i32) {
    %c0_i32 = arith.constant 0 : i32
    %c0_i32_0 = arith.constant 0 : i32
    return %c0_i32, %arg1 : i32, i32
  }
  func.func @transform_2(%arg0: i32, %arg1: i32) -> (i32, i32) {
    %c0_i32 = arith.constant 0 : i32
    %c0_i32_0 = arith.constant 0 : i32
    return %c0_i32, %arg1 : i32, i32
  }
  func.func @transform_3(%arg0: i32, %arg1: i32) -> (i32, i32) {
    %c0_i32 = arith.constant 0 : i32
    return %arg0, %arg1 : i32, i32
  }
}

</mosaic_0001>

<llo_original>
// kernel: tpu_custom_call.1
$region0: #{tpu_custom_call.1}
  #allocation0 [shape = 'u32[]', space=smem, size = 0x4, offset = 0x4, fixed_abs, tag = 'smem constant byte address 0x4 - core index']
  #allocation1 [shape = 'u32[144,128]{1,0:T(1,128)}', space=vmem, size = 0x12000, scoped, tag = 'internal scratch']
  %s0 = inlined_call_operand.hbm [shape: bf16[16,128], index: 0, kind: input, shape index: {}]
  %s1 = inlined_call_operand.hbm [shape: bf16[128,128], index: 1, kind: input, shape index: {}]
  %s2 = inlined_call_operand.vmem [shape: f32[1,128], index: 2, kind: input, shape index: {}]
  %s3 = inlined_call_operand.hbm [shape: f32[16,128], index: 3, kind: output, shape index: {}]
  %s4 = sld [smem:[#allocation0]]
  $region30: #{tpu_custom_call.1} parent=0
    _
  %s6 = ssub.s32 1, %s4
  %s7 = scalar_select 0, %s6, %s4
  $region1: #{tpu_custom_call.1} parent=0
    #allocation2 [shape = 'u8[4096]{0}', space=vmem, size = 0x1000, scoped, tag = 'input window, operand 0, single buffered']
    #allocation3 [shape = 's32[1]{0}', space=sflag, size = 0x4, scoped, tag = 'scoped memory for tpu_custom_call.1']
    #allocation4 [shape = 's32[1]{0}', space=sflag, size = 0x4, scoped, tag = 'scoped memory for tpu_custom_call.1']
    #allocation5 [shape = 'u8[32768]{0}', space=vmem, size = 0x8000, scoped, tag = 'input window, operand 1, single buffered']
    #allocation6 [shape = 's32[1]{0}', space=sflag, size = 0x4, scoped, tag = 'scoped memory for tpu_custom_call.1']
    #allocation7 [shape = 'u8[8192]{0}', space=vmem, size = 0x2000, scoped, tag = 'output window, operand 0, single buffered']
    %8 = vsyncpa [#allocation3], 0
    %9 = vsyncpa [#allocation6], 0
    %10 = vsyncpa [#allocation4], 0
    // Predicated region
    $region2: #{tpu_custom_call.1} parent=1 // pred_check
      _
    $region3: #{tpu_custom_call.1} parent=1 // pred_check_branch
      %12 = sbr.rel (0) target = $region5
    $region4: #{tpu_custom_call.1} parent=1 // pred_region
      %s14 = ssub.s32 128, 128
      %15 = vsyncadd [#allocation3], %s14
      %s16 = sshll.u32 [#allocation2], 4
      %s17 = int_to_ptr.vmem [resolvable:$true] %s16
      %22 = dma.hbm_to_vmem [thread:$0]  %s0, 128, %s17, [#allocation3], 64, 64, 4
    $region5: #{tpu_custom_call.1} parent=1 // pred_fallthru
      _
    // Predicated region
    $region6: #{tpu_custom_call.1} parent=1 // pred_check
      _
    $region7: #{tpu_custom_call.1} parent=1 // pred_check_branch
      %24 = sbr.rel (0) target = $region9
    $region8: #{tpu_custom_call.1} parent=1 // pred_region
      %s26 = ssub.s32 1024, 1024
      %27 = vsyncadd [#allocation6], %s26
      %s28 = sshll.u32 [#allocation5], 4
      %s29 = int_to_ptr.vmem [resolvable:$true] %s28
      %34 = dma.hbm_to_vmem [thread:$0]  %s1, 1024, %s29, [#allocation6], 64, 64, 4
    $region9: #{tpu_custom_call.1} parent=1 // pred_fallthru
      _
    // Predicated region
    $region10: #{tpu_custom_call.1} parent=1 // pred_check
      _
    $region11: #{tpu_custom_call.1} parent=1 // pred_check_branch
      %36 = sbr.rel (0) target = $region13
    $region12: #{tpu_custom_call.1} parent=1 // pred_region
      _
    $region13: #{tpu_custom_call.1} parent=1 // pred_fallthru
      _
    // Predicated region
    $region14: #{tpu_custom_call.1} parent=1 // pred_check
      _
    $region15: #{tpu_custom_call.1} parent=1 // pred_check_branch
      %38 = sbr.rel (0) target = $region17
    $region16: #{tpu_custom_call.1} parent=1 // pred_region
      %39 = dma.done [#allocation3], 128
    $region17: #{tpu_custom_call.1} parent=1 // pred_fallthru
      _
    // Predicated region
    $region18: #{tpu_custom_call.1} parent=1 // pred_check
      _
    $region19: #{tpu_custom_call.1} parent=1 // pred_check_branch
      %41 = sbr.rel (0) target = $region21
    $region20: #{tpu_custom_call.1} parent=1 // pred_region
      %42 = dma.done [#allocation6], 1024
    $region21: #{tpu_custom_call.1} parent=1 // pred_fallthru
      _
    %v44 = vld [vmem:[#allocation2] sm:$0xf]
    %v45 = vld [vmem:[#allocation2 + $0x4] sm:$0xf]
    %v46 = vld [vmem:[#allocation5] sm:$0xf]
    %v47 = vld [vmem:[#allocation5 + $0x4] sm:$0xf]
    %v48 = vld [vmem:[#allocation5 + $0x8] sm:$0xf]
    %v49 = vld [vmem:[#allocation5 + $0xc] sm:$0xf]
    %v50 = vld [vmem:[#allocation5 + $0x10] sm:$0xf]
    %v51 = vld [vmem:[#allocation5 + $0x14] sm:$0xf]
    %v52 = vld [vmem:[#allocation5 + $0x18] sm:$0xf]
    %v53 = vld [vmem:[#allocation5 + $0x1c] sm:$0xf]
    %v54 = vld [vmem:[#allocation5 + $0x20] sm:$0xf]
    %v55 = vld [vmem:[#allocation5 + $0x24] sm:$0xf]
    %v56 = vld [vmem:[#allocation5 + $0x28] sm:$0xf]
    %v57 = vld [vmem:[#allocation5 + $0x2c] sm:$0xf]
    %v58 = vld [vmem:[#allocation5 + $0x30] sm:$0xf]
    %v59 = vld [vmem:[#allocation5 + $0x34] sm:$0xf]
    %v60 = vld [vmem:[#allocation5 + $0x38] sm:$0xf]
    %v61 = vld [vmem:[#allocation5 + $0x3c] sm:$0xf]
    %v62 = vld [vmem:[%s2] sm:$0x1]
    %v64 = vlaneseq
    %v65 = vshrl.u32 %v64, 7
    %v66 = vsub.s32 0, %v65
    %v67 = vrot.slane %v62, %v66
    %v71 = vunpack.c.l.b16 %v44
    %v72 = vunpack.c.l.b16 %v45
    %v73 = vpack.c.b16 %v72, %v71
    %v91 = vunpack.c.l.b16 %v46
    %v92 = vunpack.c.l.b16 %v47
    %v93 = vunpack.c.l.b16 %v48
    %v94 = vunpack.c.l.b16 %v49
    %v95 = vunpack.c.l.b16 %v50
    %v96 = vunpack.c.l.b16 %v51
    %v97 = vunpack.c.l.b16 %v52
    %v98 = vunpack.c.l.b16 %v53
    %v99 = vunpack.c.l.b16 %v54
    %v100 = vunpack.c.l.b16 %v55
    %v101 = vunpack.c.l.b16 %v56
    %v102 = vunpack.c.l.b16 %v57
    %v103 = vunpack.c.l.b16 %v58
    %v104 = vunpack.c.l.b16 %v59
    %v105 = vunpack.c.l.b16 %v60
    %v106 = vunpack.c.l.b16 %v61
    %v107 = vpack.c.b16 %v92, %v91
    %v108 = vpack.c.b16 %v94, %v93
    %v109 = vpack.c.b16 %v96, %v95
    %v110 = vpack.c.b16 %v98, %v97
    %v111 = vpack.c.b16 %v100, %v99
    %v112 = vpack.c.b16 %v102, %v101
    %v113 = vpack.c.b16 %v104, %v103
    %v114 = vpack.c.b16 %v106, %v105
    %123 = vmatprep.subr.bf16.mxu0 0
    %124 = vmatpush1.bf16.msra.mxu0 %v107
    %125 = vmatprep.subr.bf16.mxu0 0
    %126 = vmatpush1.bf16.msra.mxu0 %v108
    %127 = vmatprep.subr.bf16.mxu0 0
    %128 = vmatpush1.bf16.msra.mxu0 %v109
    %129 = vmatprep.subr.bf16.mxu0 0
    %130 = vmatpush1.bf16.msra.mxu0 %v110
    %131 = vmatprep.subr.bf16.mxu0 0
    %132 = vmatpush1.bf16.msra.mxu0 %v111
    %133 = vmatprep.subr.bf16.mxu0 0
    %134 = vmatpush1.bf16.msra.mxu0 %v112
    %135 = vmatprep.subr.bf16.mxu0 0
    %136 = vmatpush1.bf16.msra.mxu0 %v113
    %137 = vmatprep.subr.bf16.mxu0 0
    %138 = vmatpush1.bf16.msra.mxu0 %v114
    %139 = vmatprep.subr.bf16.mxu0 0
    %140 = vmatpush1.bf16.msra.mxu0 0
    %141 = vmatprep.subr.bf16.mxu0 0
    %142 = vmatpush1.bf16.msra.mxu0 0
    %143 = vmatprep.subr.bf16.mxu0 0
    %144 = vmatpush1.bf16.msra.mxu0 0
    %145 = vmatprep.subr.bf16.mxu0 0
    %146 = vmatpush1.bf16.msra.mxu0 0
    %147 = vmatprep.subr.bf16.mxu0 0
    %148 = vmatpush1.bf16.msra.mxu0 0
    %149 = vmatprep.subr.bf16.mxu0 0
    %150 = vmatpush1.bf16.msra.mxu0 0
    %151 = vmatprep.subr.bf16.mxu0 0
    %152 = vmatpush1.bf16.msra.mxu0 0
    %153 = vmatprep.subr.bf16.mxu0 0
    %154 = vmatpush1.bf16.msra.mxu0 0
    %155 = vmatprep.mubr.bf16.mxu0 0
    %156 = vmatmul.mubr.bf16.gmra.mrb[0].mxu0 %v73
    %v157 = vpop.f32.mrb[0].mxu0
    %v158 = vadd.f32 %v67, %v157
    %v159 = vpop.f32.mrb[0].mxu0
    %v160 = vpop.f32.mrb[0].mxu0
    %v161 = vadd.f32 %v67, %v160
    %v162 = vpop.f32.mrb[0].mxu0
    %163 = vdwg.mxu0
    %164 = vst [vmem:[#allocation7] sm:$0xff] %v158
    %165 = vst [vmem:[#allocation7 + $0x8] sm:$0xff] %v161
    // Predicated region
    $region22: #{tpu_custom_call.1} parent=1 // pred_check
      _
    $region23: #{tpu_custom_call.1} parent=1 // pred_check_branch
      %167 = sbr.rel (0) target = $region25
    $region24: #{tpu_custom_call.1} parent=1 // pred_region
      %s169 = ssub.s32 256, 256
      %170 = vsyncadd [#allocation4], %s169
      %s171 = sshll.u32 [#allocation7], 4
      %s172 = int_to_ptr.vmem [resolvable:$true] %s171
      %177 = dma.vmem_to_hbm [thread:$0]  %s172, 256, %s3, [#allocation4], 128, 128, 8
    $region25: #{tpu_custom_call.1} parent=1 // pred_fallthru
      _
    // Predicated region
    $region26: #{tpu_custom_call.1} parent=1 // pred_check
      _
    $region27: #{tpu_custom_call.1} parent=1 // pred_check_branch
      %179 = sbr.rel (0) target = $region29
    $region28: #{tpu_custom_call.1} parent=1 // pred_region
      %180 = dma.done [#allocation4], 256
    $region29: #{tpu_custom_call.1} parent=1 // pred_fallthru
      _
    %181 = vsyncpa [#allocation3], 1
    %182 = vsyncpa [#allocation6], 1
    %183 = vsyncpa [#allocation4], 1

</llo_original>
